<compile_context>
chip_gen: v7x
topology: tpu7x:2x2x1
jax: 0.10.0
libtpu: 0.0.40
codegen_flags: <defaults>
</compile_context>

<pallas_src>
import functools
from typing import NamedTuple

import numpy as np

import jax
import jax.numpy as jnp
from jax.experimental import pallas as pl
from jax.experimental.pallas import tpu as pltpu

LANE = 128


def _round_up(n, m):
    return ((n + m - 1) // m) * m


# ---------------------------------------------------------------------------
# Kernel body: full Linear -> ReLU -> ... -> Linear stack on one row tile.
# ---------------------------------------------------------------------------
def _mlp_kernel(n_layers, n_sub, compute_dtype, *refs):
    """refs = (x_ref, w0, b0, w1, b1, ..., w_{L-1}, b_{L-1}, o_ref)."""
    x_ref = refs[0]
    o_ref = refs[-1]
    prm = refs[1:-1]

    rows = x_ref.shape[0]
    sub = rows // n_sub
    # Unrolled, independent row sub-chunks land in one basic block, so the VLIW
    # scheduler can hide chunk c's VPU epilogue (bias add + ReLU + cast) under
    # chunk c+1's MXU matmuls.
    for c in range(n_sub):
        r0 = c * sub
        h = x_ref[r0:r0 + sub, :].astype(compute_dtype)
        for i in range(n_layers):
            w = prm[2 * i][...]                 # compute_dtype (bf16 or f32)
            b = prm[2 * i + 1][...]             # f32 [1, out], broadcasts over rows
            # MXU matmul with f32 accumulation; bias/ReLU stay f32 on the VPU.
            acc = jnp.dot(h, w, preferred_element_type=jnp.float32) + b
            if i < n_layers - 1:
                h = jnp.maximum(acc, 0.0).astype(compute_dtype)
            else:
                h = acc
        o_ref[r0:r0 + sub, :] = h.astype(o_ref.dtype)


# ---------------------------------------------------------------------------
# One-time weight preparation (lane padding + cast), cached by identity.
# ---------------------------------------------------------------------------
class PreparedMLPParams(NamedTuple):
    flat: tuple           # (w0, b0, w1, b1, ...), lane-padded / cast
    sizes_pad: tuple      # [in_size, hid1_pad, ..., out_size]
    in_size: int
    out_size: int
    n_layers: int
    compute_dtype: np.dtype
    weight_bytes: int


def prepare_mlp_params(params, compute_dtype=jnp.float32):
    """One-time padding + cast of MLP weights (call once, reuse every forward).

    params: list of (W [in_i, out_i], b [1, out_i]) per Linear layer
            (W stored transposed relative to torch.nn.Linear.weight).
    Hidden widths are zero-padded to multiples of 128: padded columns stay
    exactly 0 through bias add and ReLU, so the math is unchanged.  The input
    and final-output widths keep their true sizes (block dim == full array dim
    is always legal; a narrow final store beats 16x write inflation plus a
    post-kernel slice).
    """
    compute_dtype = np.dtype(compute_dtype)
    n_layers = len(params)
    in_size = params[0][0].shape[0]
    out_size = params[-1][0].shape[1]
    sizes = [in_size] + [w.shape[1] for w, _ in params]
    sizes_pad = ([in_size]
                 + [_round_up(s, LANE) for s in sizes[1:-1]]
                 + [out_size])

    flat = []
    for i, (w, b) in enumerate(params):
        ip, op = sizes_pad[i], sizes_pad[i + 1]
        w_pad = (jnp.zeros((ip, op), compute_dtype)
                 .at[: w.shape[0], : w.shape[1]].set(w.astype(compute_dtype)))
        b_pad = (jnp.zeros((1, op), jnp.float32)
                 .at[:, : b.shape[1]].set(b.astype(jnp.float32)))
        flat += [w_pad, b_pad]

    weight_bytes = sum(int(p.nbytes) for p in flat)
    return PreparedMLPParams(tuple(flat), tuple(sizes_pad), in_size, out_size,
                             n_layers, compute_dtype, weight_bytes)


_PREP_CACHE = {}


def _cached_prepare(params, compute_dtype):
    # Cached by params identity + dtype so the pad/cast HBM pass happens once
    # per parameter set, not per forward call.  Long-lived code should call
    # prepare_mlp_params() explicitly and pass `prepared=`.
    key = (tuple((id(w), id(b)) for w, b in params), np.dtype(compute_dtype).str)
    prep = _PREP_CACHE.get(key)
    if prep is None:
        prep = prepare_mlp_params(params, compute_dtype)
        _PREP_CACHE[key] = prep
    return prep


# ---------------------------------------------------------------------------
# Generation-aware hardware queries.
# ---------------------------------------------------------------------------
def _tpu_vmem_and_cores():
    vmem = 64 << 20    # conservative default = v7x per-TC VMEM
    cores = 1
    try:
        info = pltpu.get_tpu_info()
        vmem = int(getattr(info, "vmem_capacity_bytes", vmem))
        for attr in ("num_tensorcores", "tensorcore_count", "num_cores",
                     "core_count"):
            v = getattr(info, attr, None)
            if v:
                cores = int(v)
                break
    except Exception:
        pass
    return vmem, cores


def _pick_n_sub(tile_m):
    # 2-4 independent sub-chunks of >= 256 rows each (keeps v5e f32
    # intermediates mostly in vregs while still giving MXU/VPU overlap).
    if tile_m < 512:
        return 1
    for n in (4, 3, 2):
        sub = tile_m // n
        if tile_m % n == 0 and sub % 8 == 0 and sub >= 256:
            return n
    return 1


# ---------------------------------------------------------------------------
# Forward wrapper.
# ---------------------------------------------------------------------------
def mlp_tokenizer_forward(x, params=None, *, prepared=None, tile_m=1024,
                          compute_dtype=None):
    """Fused MLPTokenizer forward: x [N, in_size] -> [N, out_size].

    compute_dtype: dtype of the matmul operands (jnp.bfloat16 is the v6e/v7x
    fast path; accumulation and the bias/ReLU epilogue are always f32).
    Defaults to x.dtype so the f32 path stays bit-exact.
    """
    if prepared is None:
        if params is None:
            raise ValueError("either `params` or `prepared` must be given")
        prepared = _cached_prepare(params, compute_dtype or x.dtype)

    N, in_size = x.shape
    assert in_size == prepared.in_size, "x feature size mismatch"
    out_size = prepared.out_size
    out_dtype = x.dtype
    compute_dtype = prepared.compute_dtype
    n_layers = prepared.n_layers
    flat_params = list(prepared.flat)
    sizes_pad = prepared.sizes_pad
    weight_bytes = prepared.weight_bytes

    vmem_cap, cores = _tpu_vmem_and_cores()
    vmem_budget = int(vmem_cap * 0.8)       # headroom for Mosaic scratch / sems

    if weight_bytes > vmem_budget:
        # TODO(synk): stream oversized weights from HBM (memory_space=pl.ANY +
        # pltpu.emit_pipeline K-tiling) instead of keeping them VMEM-resident;
        # needed for very wide layers on v7x (64 MiB per-TC VMEM).
        raise NotImplementedError(
            f"resident weights ({weight_bytes} B) exceed the VMEM budget "
            f"({vmem_budget} B); HBM-streamed weights are not implemented.")

    # ---- batch (sublane) tiling: NO wrapper-side padding of x ---------------
    x_item = np.dtype(x.dtype).itemsize
    out_item = np.dtype(out_dtype).itemsize
    c_item = compute_dtype.itemsize
    max_w = max(sizes_pad[1:])
    io_per_row = in_size * x_item + out_size * out_item      # pipelined tiles
    act_per_row = max_w * (4 + c_item)                       # f32 acc + h

    def vmem_need(tm):
        # Weights single-buffered (counted once); x/out tiles double-buffered.
        return weight_bytes + 2 * tm * io_per_row + tm * act_per_row

    tile_m = int(tile_m)
    if tile_m >= N:
        tile_m = N                       # full-dim block: always legal
    else:
        tile_m = max(8, (tile_m // 8) * 8)
    if cores > 1:                        # >= 2 grid steps per TensorCore (v7x)
        target_steps = 2 * cores
        if pl.cdiv(N, tile_m) < target_steps and N >= target_steps * 8:
            tile_m = _round_up(pl.cdiv(N, target_steps), 8)
    while tile_m > 8 and vmem_need(tile_m) > vmem_budget:
        tile_m = max(8, ((tile_m // 2) // 8) * 8)

    grid = (pl.cdiv(N, tile_m),)
    n_sub = _pick_n_sub(tile_m)

    vmem_limit = int(min(max(int(1.5 * vmem_need(tile_m)), 32 << 20),
                         vmem_budget))

    flops = 2 * N * sum(sizes_pad[i] * sizes_pad[i + 1] for i in range(n_layers))
    bytes_accessed = int(x.nbytes) + weight_bytes + N * out_size * out_item
    cost = pl.CostEstimate(flops=int(flops), transcendentals=0,
                           bytes_accessed=int(bytes_accessed))

    kernel = functools.partial(_mlp_kernel, n_layers, n_sub, compute_dtype)

    def _build(single_buffer_weights, limit):
        wkw = ({"pipeline_mode": pl.Buffered(1)}
               if single_buffer_weights else {})
        in_specs = [pl.BlockSpec((tile_m, in_size), lambda i: (i, 0))]
        for p in flat_params:
            # Grid-invariant block: DMA'd once, resident across all grid steps.
            in_specs.append(pl.BlockSpec(p.shape, lambda i: (0, 0), **wkw))
        out_spec = pl.BlockSpec((tile_m, out_size), lambda i: (i, 0))
        return pl.pallas_call(
            kernel,
            out_shape=jax.ShapeDtypeStruct((N, out_size), out_dtype),
            grid_spec=pltpu.PrefetchScalarGridSpec(
                num_scalar_prefetch=0, grid=grid,
                in_specs=in_specs, out_specs=out_spec),
            compiler_params=pltpu.CompilerParams(
                dimension_semantics=("parallel",),
                vmem_limit_bytes=limit),
            cost_estimate=cost,
        )

    try:
        return _build(True, vmem_limit)(x, *flat_params)
    except (TypeError, ValueError, NotImplementedError,
            pltpu.LoweringException):
        # Narrow fallback: only for jax versions rejecting pipeline_mode /
        # Buffered(1). Give the double-buffered weights extra budget.
        limit2 = int(min(vmem_limit + weight_bytes, vmem_budget))
        return _build(False, limit2)(x, *flat_params)


# ---------------------------------------------------------------------------
# Parameter init + pure-JAX reference (mirrors the PyTorch module).
# ---------------------------------------------------------------------------
def init_mlp_params(key, in_size, out_size, hidden_layers):
    """PyTorch nn.Linear(in, out) has weight [out, in]; we store its transpose
    [in, out] plus bias [1, out]. Init ~ U(-1/sqrt(fan_in), 1/sqrt(fan_in))."""
    sizes = [in_size] + list(hidden_layers) + [out_size]
    params = []
    for i in range(len(sizes) - 1):
        fan_in, fan_out = sizes[i], sizes[i + 1]
        key, kw, kb = jax.random.split(key, 3)
        bound = 1.0 / jnp.sqrt(jnp.float32(fan_in))
        w = jax.random.uniform(kw, (fan_in, fan_out), jnp.float32, -bound, bound)
        b = jax.random.uniform(kb, (1, fan_out), jnp.float32, -bound, bound)
        params.append((w, b))
    return params


def mlp_reference(x, params):
    h = x
    for i, (w, b) in enumerate(params):
        h = h @ w + b
        if i < len(params) - 1:
            h = jnp.maximum(h, 0.0)
    return h


if __name__ == "__main__":
    # MLPTokenizer(in_size=16, out_size=8, hidden_layers=[32, 32]).
    in_size, out_size, hidden_layers = 16, 8, (32, 32)
    batch = 8

    key = jax.random.PRNGKey(0)
    key, kx = jax.random.split(key)
    x = jax.random.normal(kx, (batch, in_size), jnp.float32)
    params = init_mlp_params(key, in_size, out_size, hidden_layers)
    ref = mlp_reference(x, params)

    # One-time weight preparation (padded/cast once, reused across calls).
    prep_f32 = prepare_mlp_params(params, jnp.float32)

    # f32 path (exact check).
    out = jax.block_until_ready(mlp_tokenizer_forward(x, prepared=prep_f32))
    assert out.shape == (batch, out_size)
    assert jnp.allclose(out, ref, atol=1e-5, rtol=1e-5)

    # Ragged batch: exercises the cdiv grid + masked partial last block
    # (no wrapper-side x padding, cached prepare path).
    x2 = jax.random.normal(jax.random.PRNGKey(1), (40, in_size), jnp.float32)
    ref2 = mlp_reference(x2, params)
    out2 = jax.block_until_ready(mlp_tokenizer_forward(x2, params, tile_m=16))
    assert out2.shape == (40, out_size)
    assert jnp.allclose(out2, ref2, atol=1e-5, rtol=1e-5)

    # bf16 matmul operands + f32 accumulation (v6e/v7x fast path). The loose
    # tolerance is expected: x and W are quantized to bf16 before the first
    # matmul, so this is not a mixed-precision error bound.
    out_bf16 = jax.block_until_ready(
        mlp_tokenizer_forward(x, params, compute_dtype=jnp.bfloat16))
    assert out_bf16.shape == (batch, out_size)
    assert jnp.allclose(out_bf16, ref, atol=1e-1, rtol=1e-1)

    print("KERNEL_OK")
</pallas_src>

<mosaic_0001>
module attributes {stable_mosaic.version = 11 : i64} {
  func.func @_mlp_kernel(%arg0: i32, %arg1: memref<8x16xf32, #tpu.memory_space<vmem>>, %arg2: memref<16x128xf32, #tpu.memory_space<vmem>>, %arg3: memref<1x128xf32, #tpu.memory_space<vmem>>, %arg4: memref<128x128xf32, #tpu.memory_space<vmem>>, %arg5: memref<1x128xf32, #tpu.memory_space<vmem>>, %arg6: memref<128x8xf32, #tpu.memory_space<vmem>>, %arg7: memref<1x8xf32, #tpu.memory_space<vmem>>, %arg8: memref<8x8xf32, #tpu.memory_space<vmem>>) attributes {dimension_semantics = [#tpu.dimension_semantics<parallel>], iteration_bounds = array<i64: 1>, scalar_prefetch = 0 : i64, scratch_operands = 0 : i64, tpu.core_type = #tpu.core_type<tc>, window_params = [{transform_indices = @transform_0, window_bounds = array<i64: 8, 16>}, {pipeline_mode = #tpu.pipeline_mode<synchronous>, transform_indices = @transform_1, window_bounds = array<i64: 16, 128>}, {pipeline_mode = #tpu.pipeline_mode<synchronous>, transform_indices = @transform_2, window_bounds = array<i64: 1, 128>}, {pipeline_mode = #tpu.pipeline_mode<synchronous>, transform_indices = @transform_3, window_bounds = array<i64: 128, 128>}, {pipeline_mode = #tpu.pipeline_mode<synchronous>, transform_indices = @transform_4, window_bounds = array<i64: 1, 128>}, {pipeline_mode = #tpu.pipeline_mode<synchronous>, transform_indices = @transform_5, window_bounds = array<i64: 128, 8>}, {pipeline_mode = #tpu.pipeline_mode<synchronous>, transform_indices = @transform_6, window_bounds = array<i64: 1, 8>}, {transform_indices = @transform_7, window_bounds = array<i64: 8, 8>}]} {
    %c0 = arith.constant 0 : index
    %c0_0 = arith.constant 0 : index
    %0 = vector.load %arg1[%c0, %c0_0] : memref<8x16xf32, #tpu.memory_space<vmem>>, vector<8x16xf32>
    %c0_1 = arith.constant 0 : index
    %c0_2 = arith.constant 0 : index
    %1 = vector.load %arg2[%c0_1, %c0_2] : memref<16x128xf32, #tpu.memory_space<vmem>>, vector<16x128xf32>
    %c0_3 = arith.constant 0 : index
    %c0_4 = arith.constant 0 : index
    %2 = vector.load %arg3[%c0_3, %c0_4] : memref<1x128xf32, #tpu.memory_space<vmem>>, vector<1x128xf32>
    %cst = arith.constant dense<0.000000e+00> : vector<8x128xf32>
    %3 = tpu.matmul %0, %1, %cst {dimension_numbers = #tpu.dot_dimension_numbers<[1], [0], [0], [1], [0, 0, 1, 1], [], []>} : vector<8x16xf32>, vector<16x128xf32>, vector<8x128xf32> -> vector<8x128xf32>
    %4 = vector.broadcast %2 : vector<1x128xf32> to vector<8x128xf32>
    %5 = arith.addf %3, %4 : vector<8x128xf32>
    %cst_5 = arith.constant 0.000000e+00 : f32
    %6 = vector.broadcast %cst_5 : f32 to vector<8x128xf32>
    %7 = arith.maximumf %5, %6 : vector<8x128xf32>
    %c0_6 = arith.constant 0 : index
    %c0_7 = arith.constant 0 : index
    %8 = vector.load %arg4[%c0_6, %c0_7] : memref<128x128xf32, #tpu.memory_space<vmem>>, vector<128x128xf32>
    %c0_8 = arith.constant 0 : index
    %c0_9 = arith.constant 0 : index
    %9 = vector.load %arg5[%c0_8, %c0_9] : memref<1x128xf32, #tpu.memory_space<vmem>>, vector<1x128xf32>
    %cst_10 = arith.constant dense<0.000000e+00> : vector<8x128xf32>
    %10 = tpu.matmul %7, %8, %cst_10 {dimension_numbers = #tpu.dot_dimension_numbers<[1], [0], [0], [1], [0, 0, 1, 1], [], []>} : vector<8x128xf32>, vector<128x128xf32>, vector<8x128xf32> -> vector<8x128xf32>
    %11 = vector.broadcast %9 : vector<1x128xf32> to vector<8x128xf32>
    %12 = arith.addf %10, %11 : vector<8x128xf32>
    %cst_11 = arith.constant 0.000000e+00 : f32
    %13 = vector.broadcast %cst_11 : f32 to vector<8x128xf32>
    %14 = arith.maximumf %12, %13 : vector<8x128xf32>
    %c0_12 = arith.constant 0 : index
    %c0_13 = arith.constant 0 : index
    %15 = vector.load %arg6[%c0_12, %c0_13] : memref<128x8xf32, #tpu.memory_space<vmem>>, vector<128x8xf32>
    %c0_14 = arith.constant 0 : index
    %c0_15 = arith.constant 0 : index
    %16 = vector.load %arg7[%c0_14, %c0_15] : memref<1x8xf32, #tpu.memory_space<vmem>>, vector<1x8xf32>
    %cst_16 = arith.constant dense<0.000000e+00> : vector<8x8xf32>
    %17 = tpu.matmul %14, %15, %cst_16 {dimension_numbers = #tpu.dot_dimension_numbers<[1], [0], [0], [1], [0, 0, 1, 1], [], []>} : vector<8x128xf32>, vector<128x8xf32>, vector<8x8xf32> -> vector<8x8xf32>
    %18 = vector.broadcast %16 : vector<1x8xf32> to vector<8x8xf32>
    %19 = arith.addf %17, %18 : vector<8x8xf32>
    %c0_17 = arith.constant 0 : index
    %c0_18 = arith.constant 0 : index
    %20 = vector.load %arg8[%c0_17, %c0_18] : memref<8x8xf32, #tpu.memory_space<vmem>>, vector<8x8xf32>
    tpu.vector_store %arg8[%c0_17, %c0_18], %19 {strides = array<i32>} : memref<8x8xf32, #tpu.memory_space<vmem>>, vector<8x8xf32>,
    return
  }
  func.func @transform_0(%arg0: i32) -> (i32, i32) {
    %c0_i32 = arith.constant 0 : i32
    %c0_i32_0 = arith.constant 0 : i32
    return %arg0, %c0_i32 : i32, i32
  }
  func.func @transform_1(%arg0: i32) -> (i32, i32) {
    %c0_i32 = arith.constant 0 : i32
    %c0_i32_0 = arith.constant 0 : i32
    %c0_i32_1 = arith.constant 0 : i32
    return %c0_i32, %c0_i32_0 : i32, i32
  }
  func.func @transform_2(%arg0: i32) -> (i32, i32) {
    %c0_i32 = arith.constant 0 : i32
    %c0_i32_0 = arith.constant 0 : i32
    %c0_i32_1 = arith.constant 0 : i32
    return %c0_i32, %c0_i32_0 : i32, i32
  }
  func.func @transform_3(%arg0: i32) -> (i32, i32) {
    %c0_i32 = arith.constant 0 : i32
    %c0_i32_0 = arith.constant 0 : i32
    %c0_i32_1 = arith.constant 0 : i32
    return %c0_i32, %c0_i32_0 : i32, i32
  }
  func.func @transform_4(%arg0: i32) -> (i32, i32) {
    %c0_i32 = arith.constant 0 : i32
    %c0_i32_0 = arith.constant 0 : i32
    %c0_i32_1 = arith.constant 0 : i32
    return %c0_i32, %c0_i32_0 : i32, i32
  }
  func.func @transform_5(%arg0: i32) -> (i32, i32) {
    %c0_i32 = arith.constant 0 : i32
    %c0_i32_0 = arith.constant 0 : i32
    %c0_i32_1 = arith.constant 0 : i32
    return %c0_i32, %c0_i32_0 : i32, i32
  }
  func.func @transform_6(%arg0: i32) -> (i32, i32) {
    %c0_i32 = arith.constant 0 : i32
    %c0_i32_0 = arith.constant 0 : i32
    %c0_i32_1 = arith.constant 0 : i32
    return %c0_i32, %c0_i32_0 : i32, i32
  }
  func.func @transform_7(%arg0: i32) -> (i32, i32) {
    %c0_i32 = arith.constant 0 : i32
    %c0_i32_0 = arith.constant 0 : i32
    return %arg0, %c0_i32 : i32, i32
  }
}

</mosaic_0001>

<llo_original>
// kernel: tpu_custom_call.1
$region0: #{tpu_custom_call.1}
  #allocation0 [shape = 'u32[]', space=smem, size = 0x4, offset = 0x4, fixed_abs, tag = 'smem constant byte address 0x4 - core index']
  #allocation1 [shape = 'u32[144,128]{1,0:T(1,128)}', space=vmem, size = 0x12000, scoped, tag = 'internal scratch']
  %s0 = inlined_call_operand.hbm [shape: f32[8,16], index: 0, kind: input, shape index: {}]
  %s1 = inlined_call_operand.vmem [shape: f32[16,128], index: 1, kind: input, shape index: {}]
  %s2 = inlined_call_operand.vmem [shape: f32[1,128], index: 2, kind: input, shape index: {}]
  %s3 = inlined_call_operand.vmem [shape: f32[128,128], index: 3, kind: input, shape index: {}]
  %s4 = inlined_call_operand.vmem [shape: f32[1,128], index: 4, kind: input, shape index: {}]
  %s5 = inlined_call_operand.vmem [shape: f32[128,8], index: 5, kind: input, shape index: {}]
  %s6 = inlined_call_operand.vmem [shape: f32[1,8], index: 6, kind: input, shape index: {}]
  %s7 = inlined_call_operand.hbm [shape: f32[8,8], index: 7, kind: output, shape index: {}]
  %s8 = sld [smem:[#allocation0]]
  $region42: #{tpu_custom_call.1} parent=0
    _
  %s10 = ssub.s32 1, %s8
  %s11 = scalar_select 0, %s10, %s8
  $region1: #{tpu_custom_call.1} parent=0
    #allocation2 [shape = 'u8[4096]{0}', space=vmem, size = 0x1000, scoped, tag = 'input window, operand 0, single buffered']
    #allocation3 [shape = 's32[1]{0}', space=sflag, size = 0x4, scoped, tag = 'scoped memory for tpu_custom_call.1']
    #allocation4 [shape = 's32[1]{0}', space=sflag, size = 0x4, scoped, tag = 'scoped memory for tpu_custom_call.1']
    #allocation5 [shape = 'u8[4096]{0}', space=vmem, size = 0x1000, scoped, tag = 'output window, operand 0, single buffered']
    %12 = vsyncpa [#allocation3], 0
    %13 = vsyncpa [#allocation4], 0
    // Predicated region
    $region2: #{tpu_custom_call.1} parent=1 // pred_check
      _
    $region3: #{tpu_custom_call.1} parent=1 // pred_check_branch
      %15 = sbr.rel (0) target = $region5
    $region4: #{tpu_custom_call.1} parent=1 // pred_region
      %s17 = ssub.s32 128, 128
      %18 = vsyncadd [#allocation3], %s17
      %s20 = sshll.u32 [#allocation2], 4
      %s21 = int_to_ptr.vmem [resolvable:$true] %s20
      %23 = dma.hbm_to_vmem [thread:$0]  %s0, 128, %s21, [#allocation3]
    $region5: #{tpu_custom_call.1} parent=1 // pred_fallthru
      _
    // Predicated region
    $region6: #{tpu_custom_call.1} parent=1 // pred_check
      _
    $region7: #{tpu_custom_call.1} parent=1 // pred_check_branch
      %25 = sbr.rel (0) target = $region9
    $region8: #{tpu_custom_call.1} parent=1 // pred_region
      _
    $region9: #{tpu_custom_call.1} parent=1 // pred_fallthru
      _
    // Predicated region
    $region10: #{tpu_custom_call.1} parent=1 // pred_check
      _
    $region11: #{tpu_custom_call.1} parent=1 // pred_check_branch
      %27 = sbr.rel (0) target = $region13
    $region12: #{tpu_custom_call.1} parent=1 // pred_region
      _
    $region13: #{tpu_custom_call.1} parent=1 // pred_fallthru
      _
    // Predicated region
    $region14: #{tpu_custom_call.1} parent=1 // pred_check
      _
    $region15: #{tpu_custom_call.1} parent=1 // pred_check_branch
      %29 = sbr.rel (0) target = $region17
    $region16: #{tpu_custom_call.1} parent=1 // pred_region
      _
    $region17: #{tpu_custom_call.1} parent=1 // pred_fallthru
      _
    // Predicated region
    $region18: #{tpu_custom_call.1} parent=1 // pred_check
      _
    $region19: #{tpu_custom_call.1} parent=1 // pred_check_branch
      %31 = sbr.rel (0) target = $region21
    $region20: #{tpu_custom_call.1} parent=1 // pred_region
      _
    $region21: #{tpu_custom_call.1} parent=1 // pred_fallthru
      _
    // Predicated region
    $region22: #{tpu_custom_call.1} parent=1 // pred_check
      _
    $region23: #{tpu_custom_call.1} parent=1 // pred_check_branch
      %33 = sbr.rel (0) target = $region25
    $region24: #{tpu_custom_call.1} parent=1 // pred_region
      _
    $region25: #{tpu_custom_call.1} parent=1 // pred_fallthru
      _
    // Predicated region
    $region26: #{tpu_custom_call.1} parent=1 // pred_check
      _
    $region27: #{tpu_custom_call.1} parent=1 // pred_check_branch
      %35 = sbr.rel (0) target = $region29
    $region28: #{tpu_custom_call.1} parent=1 // pred_region
      _
    $region29: #{tpu_custom_call.1} parent=1 // pred_fallthru
      _
    // Predicated region
    $region30: #{tpu_custom_call.1} parent=1 // pred_check
      _
    $region31: #{tpu_custom_call.1} parent=1 // pred_check_branch
      %37 = sbr.rel (0) target = $region33
    $region32: #{tpu_custom_call.1} parent=1 // pred_region
      %38 = dma.done [#allocation3], 128
    $region33: #{tpu_custom_call.1} parent=1 // pred_fallthru
      _
    %v39 = vld [vmem:[#allocation2] sm:$0xff]
    %v40 = vld [vmem:[%s1] sm:$0xff]
    %v41 = vld [vmem:[%s1 + $0x8] sm:$0xff]
    %v42 = vld [vmem:[%s2] sm:$0x1]
    %v44 = vlaneseq
    %v45 = vshrl.u32 %v44, 7
    %v46 = vsub.s32 0, %v45
    %v47 = vrot.slane %v42, %v46
    %vm49 = vcmask 130048
    %v51 = vsel %vm49, %v39, 0
    %53 = vmatprep.subr.mxu0 0.0
    %54 = vmatpush1.msra.mxu0 %v40
    %55 = vmatprep.subr.mxu0 0.0
    %56 = vmatpush1.msra.mxu0 %v41
    %57 = vmatprep.subr.mxu0 0.0
    %58 = vmatpush1.msra.mxu0 0.0
    %59 = vmatprep.subr.mxu0 0.0
    %60 = vmatpush1.msra.mxu0 0.0
    %61 = vmatprep.subr.mxu0 0.0
    %62 = vmatpush1.msra.mxu0 0.0
    %63 = vmatprep.subr.mxu0 0.0
    %64 = vmatpush1.msra.mxu0 0.0
    %65 = vmatprep.subr.mxu0 0.0
    %66 = vmatpush1.msra.mxu0 0.0
    %67 = vmatprep.subr.mxu0 0.0
    %68 = vmatpush1.msra.mxu0 0.0
    %69 = vmatprep.subr.mxu0 0.0
    %70 = vmatpush1.msra.mxu0 0.0
    %71 = vmatprep.subr.mxu0 0.0
    %72 = vmatpush1.msra.mxu0 0.0
    %73 = vmatprep.subr.mxu0 0.0
    %74 = vmatpush1.msra.mxu0 0.0
    %75 = vmatprep.subr.mxu0 0.0
    %76 = vmatpush1.msra.mxu0 0.0
    %77 = vmatprep.subr.mxu0 0.0
    %78 = vmatpush1.msra.mxu0 0.0
    %79 = vmatprep.subr.mxu0 0.0
    %80 = vmatpush1.msra.mxu0 0.0
    %81 = vmatprep.subr.mxu0 0.0
    %82 = vmatpush1.msra.mxu0 0.0
    %83 = vmatprep.subr.mxu0 0.0
    %84 = vmatpush1.msra.mxu0 0.0
    %85 = vmatprep.subr.mxu0 0.0
    %86 = vmatpush1.msra.mxu0 0.0
    %87 = vmatprep.subr.mxu0 0.0
    %88 = vmatpush1.msra.mxu0 0.0
    %89 = vmatprep.subr.mxu0 0.0
    %90 = vmatpush1.msra.mxu0 0.0
    %91 = vmatprep.subr.mxu0 0.0
    %92 = vmatpush1.msra.mxu0 0.0
    %93 = vmatprep.subr.mxu0 0.0
    %94 = vmatpush1.msra.mxu0 0.0
    %95 = vmatprep.subr.mxu0 0.0
    %96 = vmatpush1.msra.mxu0 0.0
    %97 = vmatprep.subr.mxu0 0.0
    %98 = vmatpush1.msra.mxu0 0.0
    %99 = vmatprep.subr.mxu0 0.0
    %100 = vmatpush1.msra.mxu0 0.0
    %101 = vmatprep.subr.mxu0 0.0
    %102 = vmatpush1.msra.mxu0 0.0
    %103 = vmatprep.subr.mxu0 0.0
    %104 = vmatpush1.msra.mxu0 0.0
    %105 = vmatprep.subr.mxu0 0.0
    %106 = vmatpush1.msra.mxu0 0.0
    %107 = vmatprep.subr.mxu0 0.0
    %108 = vmatpush1.msra.mxu0 0.0
    %109 = vmatprep.subr.mxu0 0.0
    %110 = vmatpush1.msra.mxu0 0.0
    %111 = vmatprep.subr.mxu0 0.0
    %112 = vmatpush1.msra.mxu0 0.0
    %113 = vmatprep.subr.mxu0 0.0
    %114 = vmatpush1.msra.mxu0 0.0
    %115 = vmatprep.subr.mxu0 0.0
    %116 = vmatpush1.msra.mxu0 0.0
    %117 = vmatprep.mubr.f32.mxu0 0.0
    %118 = vmatmul.mubr.f32.gmra.mrb[0].mxu0 %v51
    %v119 = vpop.f32.mrb[0].mxu0
    %v120 = vadd.f32 %v47, %v119
    %v121 = vpop.f32.mrb[0].mxu0
    %122 = vdwg.mxu0
    %v123 = vmax.f32 %v120, 0.0
    %v124 = vld [vmem:[%s3] sm:$0xff]
    %v125 = vld [vmem:[%s3 + $0x8] sm:$0xff]
    %v126 = vld [vmem:[%s3 + $0x10] sm:$0xff]
    %v127 = vld [vmem:[%s3 + $0x18] sm:$0xff]
    %v128 = vld [vmem:[%s3 + $0x20] sm:$0xff]
    %v129 = vld [vmem:[%s3 + $0x28] sm:$0xff]
    %v130 = vld [vmem:[%s3 + $0x30] sm:$0xff]
    %v131 = vld [vmem:[%s3 + $0x38] sm:$0xff]
    %v132 = vld [vmem:[%s3 + $0x40] sm:$0xff]
    %v133 = vld [vmem:[%s3 + $0x48] sm:$0xff]
    %v134 = vld [vmem:[%s3 + $0x50] sm:$0xff]
    %v135 = vld [vmem:[%s3 + $0x58] sm:$0xff]
    %v136 = vld [vmem:[%s3 + $0x60] sm:$0xff]
    %v137 = vld [vmem:[%s3 + $0x68] sm:$0xff]
    %v138 = vld [vmem:[%s3 + $0x70] sm:$0xff]
    %v139 = vld [vmem:[%s3 + $0x78] sm:$0xff]
    %v140 = vld [vmem:[%s4] sm:$0x1]
    %v142 = vlaneseq
    %v143 = vshrl.u32 %v142, 7
    %v144 = vsub.s32 0, %v143
    %v145 = vrot.slane %v140, %v144
    %147 = vmatprep.subr.mxu0 0.0
    %148 = vmatpush1.msra.mxu0 %v124
    %149 = vmatprep.subr.mxu0 0.0
    %150 = vmatpush1.msra.mxu0 %v125
    %151 = vmatprep.subr.mxu0 0.0
    %152 = vmatpush1.msra.mxu0 %v126
    %153 = vmatprep.subr.mxu0 0.0
    %154 = vmatpush1.msra.mxu0 %v127
    %155 = vmatprep.subr.mxu0 0.0
    %156 = vmatpush1.msra.mxu0 %v128
    %157 = vmatprep.subr.mxu0 0.0
    %158 = vmatpush1.msra.mxu0 %v129
    %159 = vmatprep.subr.mxu0 0.0
    %160 = vmatpush1.msra.mxu0 %v130
    %161 = vmatprep.subr.mxu0 0.0
    %162 = vmatpush1.msra.mxu0 %v131
    %163 = vmatprep.subr.mxu0 0.0
    %164 = vmatpush1.msra.mxu0 %v132
    %165 = vmatprep.subr.mxu0 0.0
    %166 = vmatpush1.msra.mxu0 %v133
    %167 = vmatprep.subr.mxu0 0.0
    %168 = vmatpush1.msra.mxu0 %v134
    %169 = vmatprep.subr.mxu0 0.0
    %170 = vmatpush1.msra.mxu0 %v135
    %171 = vmatprep.subr.mxu0 0.0
    %172 = vmatpush1.msra.mxu0 %v136
    %173 = vmatprep.subr.mxu0 0.0
    %174 = vmatpush1.msra.mxu0 %v137
    %175 = vmatprep.subr.mxu0 0.0
    %176 = vmatpush1.msra.mxu0 %v138
    %177 = vmatprep.subr.mxu0 0.0
    %178 = vmatpush1.msra.mxu0 %v139
    %179 = vmatprep.subr.mxu0 0.0
    %180 = vmatpush1.msra.mxu0 0.0
    %181 = vmatprep.subr.mxu0 0.0
    %182 = vmatpush1.msra.mxu0 0.0
    %183 = vmatprep.subr.mxu0 0.0
    %184 = vmatpush1.msra.mxu0 0.0
    %185 = vmatprep.subr.mxu0 0.0
    %186 = vmatpush1.msra.mxu0 0.0
    %187 = vmatprep.subr.mxu0 0.0
    %188 = vmatpush1.msra.mxu0 0.0
    %189 = vmatprep.subr.mxu0 0.0
    %190 = vmatpush1.msra.mxu0 0.0
    %191 = vmatprep.subr.mxu0 0.0
    %192 = vmatpush1.msra.mxu0 0.0
    %193 = vmatprep.subr.mxu0 0.0
    %194 = vmatpush1.msra.mxu0 0.0
    %195 = vmatprep.subr.mxu0 0.0
    %196 = vmatpush1.msra.mxu0 0.0
    %197 = vmatprep.subr.mxu0 0.0
    %198 = vmatpush1.msra.mxu0 0.0
    %199 = vmatprep.subr.mxu0 0.0
    %200 = vmatpush1.msra.mxu0 0.0
    %201 = vmatprep.subr.mxu0 0.0
    %202 = vmatpush1.msra.mxu0 0.0
    %203 = vmatprep.subr.mxu0 0.0
    %204 = vmatpush1.msra.mxu0 0.0
    %205 = vmatprep.subr.mxu0 0.0
    %206 = vmatpush1.msra.mxu0 0.0
    %207 = vmatprep.subr.mxu0 0.0
    %208 = vmatpush1.msra.mxu0 0.0
    %209 = vmatprep.subr.mxu0 0.0
    %210 = vmatpush1.msra.mxu0 0.0
    %211 = vmatprep.mubr.f32.mxu0 0.0
    %212 = vmatmul.mubr.f32.gmra.mrb[0].mxu0 %v123
    %v213 = vpop.f32.mrb[0].mxu0
    %v214 = vadd.f32 %v145, %v213
    %v215 = vpop.f32.mrb[0].mxu0
    %216 = vdwg.mxu0
    %v217 = vmax.f32 %v214, 0.0
    %v218 = vld [vmem:[%s5] sm:$0xff]
    %v219 = vld [vmem:[%s5 + $0x8] sm:$0xff]
    %v220 = vld [vmem:[%s5 + $0x10] sm:$0xff]
    %v221 = vld [vmem:[%s5 + $0x18] sm:$0xff]
    %v222 = vld [vmem:[%s5 + $0x20] sm:$0xff]
    %v223 = vld [vmem:[%s5 + $0x28] sm:$0xff]
    %v224 = vld [vmem:[%s5 + $0x30] sm:$0xff]
    %v225 = vld [vmem:[%s5 + $0x38] sm:$0xff]
    %v226 = vld [vmem:[%s5 + $0x40] sm:$0xff]
    %v227 = vld [vmem:[%s5 + $0x48] sm:$0xff]
    %v228 = vld [vmem:[%s5 + $0x50] sm:$0xff]
    %v229 = vld [vmem:[%s5 + $0x58] sm:$0xff]
    %v230 = vld [vmem:[%s5 + $0x60] sm:$0xff]
    %v231 = vld [vmem:[%s5 + $0x68] sm:$0xff]
    %v232 = vld [vmem:[%s5 + $0x70] sm:$0xff]
    %v233 = vld [vmem:[%s5 + $0x78] sm:$0xff]
    %v234 = vld [vmem:[%s6] sm:$0x1]
    %v236 = vlaneseq
    %v237 = vshrl.u32 %v236, 7
    %v238 = vsub.s32 0, %v237
    %v239 = vrot.slane %v234, %v238
    %241 = vmatprep.subr.mxu0 0.0
    %242 = vmatpush1.msra.mxu0 %v218
    %243 = vmatprep.subr.mxu0 0.0
    %244 = vmatpush1.msra.mxu0 %v219
    %245 = vmatprep.subr.mxu0 0.0
    %246 = vmatpush1.msra.mxu0 %v220
    %247 = vmatprep.subr.mxu0 0.0
    %248 = vmatpush1.msra.mxu0 %v221
    %249 = vmatprep.subr.mxu0 0.0
    %250 = vmatpush1.msra.mxu0 %v222
    %251 = vmatprep.subr.mxu0 0.0
    %252 = vmatpush1.msra.mxu0 %v223
    %253 = vmatprep.subr.mxu0 0.0
    %254 = vmatpush1.msra.mxu0 %v224
    %255 = vmatprep.subr.mxu0 0.0
    %256 = vmatpush1.msra.mxu0 %v225
    %257 = vmatprep.subr.mxu0 0.0
    %258 = vmatpush1.msra.mxu0 %v226
    %259 = vmatprep.subr.mxu0 0.0
    %260 = vmatpush1.msra.mxu0 %v227
    %261 = vmatprep.subr.mxu0 0.0
    %262 = vmatpush1.msra.mxu0 %v228
    %263 = vmatprep.subr.mxu0 0.0
    %264 = vmatpush1.msra.mxu0 %v229
    %265 = vmatprep.subr.mxu0 0.0
    %266 = vmatpush1.msra.mxu0 %v230
    %267 = vmatprep.subr.mxu0 0.0
    %268 = vmatpush1.msra.mxu0 %v231
    %269 = vmatprep.subr.mxu0 0.0
    %270 = vmatpush1.msra.mxu0 %v232
    %271 = vmatprep.subr.mxu0 0.0
    %272 = vmatpush1.msra.mxu0 %v233
    %273 = vmatprep.subr.mxu0 0.0
    %274 = vmatpush1.msra.mxu0 0.0
    %275 = vmatprep.subr.mxu0 0.0
    %276 = vmatpush1.msra.mxu0 0.0
    %277 = vmatprep.subr.mxu0 0.0
    %278 = vmatpush1.msra.mxu0 0.0
    %279 = vmatprep.subr.mxu0 0.0
    %280 = vmatpush1.msra.mxu0 0.0
    %281 = vmatprep.subr.mxu0 0.0
    %282 = vmatpush1.msra.mxu0 0.0
    %283 = vmatprep.subr.mxu0 0.0
    %284 = vmatpush1.msra.mxu0 0.0
    %285 = vmatprep.subr.mxu0 0.0
    %286 = vmatpush1.msra.mxu0 0.0
    %287 = vmatprep.subr.mxu0 0.0
    %288 = vmatpush1.msra.mxu0 0.0
    %289 = vmatprep.subr.mxu0 0.0
    %290 = vmatpush1.msra.mxu0 0.0
    %291 = vmatprep.subr.mxu0 0.0
    %292 = vmatpush1.msra.mxu0 0.0
    %293 = vmatprep.subr.mxu0 0.0
    %294 = vmatpush1.msra.mxu0 0.0
    %295 = vmatprep.subr.mxu0 0.0
    %296 = vmatpush1.msra.mxu0 0.0
    %297 = vmatprep.subr.mxu0 0.0
    %298 = vmatpush1.msra.mxu0 0.0
    %299 = vmatprep.subr.mxu0 0.0
    %300 = vmatpush1.msra.mxu0 0.0
    %301 = vmatprep.subr.mxu0 0.0
    %302 = vmatpush1.msra.mxu0 0.0
    %303 = vmatprep.subr.mxu0 0.0
    %304 = vmatpush1.msra.mxu0 0.0
    %305 = vmatprep.mubr.f32.mxu0 0.0
    %306 = vmatmul.mubr.f32.gmra.mrb[0].mxu0 %v217
    %v307 = vpop.f32.mrb[0].mxu0
    %v308 = vadd.f32 %v239, %v307
    %v309 = vpop.f32.mrb[0].mxu0
    %310 = vdwg.mxu0
    %vm311 = vcmask 64512
    %312 = vst.msk [vmem:[#allocation5] sm:$0xff] %vm311, %v308
    // Predicated region
    $region34: #{tpu_custom_call.1} parent=1 // pred_check
      _
    $region35: #{tpu_custom_call.1} parent=1 // pred_check_branch
      %314 = sbr.rel (0) target = $region37
    $region36: #{tpu_custom_call.1} parent=1 // pred_region
      %s316 = ssub.s32 128, 128
      %317 = vsyncadd [#allocation4], %s316
      %s319 = sshll.u32 [#allocation5], 4
      %s320 = int_to_ptr.vmem [resolvable:$true] %s319
      %322 = dma.vmem_to_hbm [thread:$0]  %s320, 128, %s7, [#allocation4]
    $region37: #{tpu_custom_call.1} parent=1 // pred_fallthru
      _
    // Predicated region
    $region38: #{tpu_custom_call.1} parent=1 // pred_check
      _
    $region39: #{tpu_custom_call.1} parent=1 // pred_check_branch
      %324 = sbr.rel (0) target = $region41
    $region40: #{tpu_custom_call.1} parent=1 // pred_region
      %325 = dma.done [#allocation4], 128
    $region41: #{tpu_custom_call.1} parent=1 // pred_fallthru
      _
    %326 = vsyncpa [#allocation3], 1
    %327 = vsyncpa [#allocation4], 1

</llo_original>
